<compile_context>
chip_gen: v7x
topology: tpu7x:2x2x1
jax: 0.10.0
libtpu: 0.0.40
codegen_flags: <defaults>
</compile_context>

<pallas_src>
import jax
import jax.numpy as jnp
import numpy as np
from jax.experimental import pallas as pl
from jax.experimental.pallas import tpu as pltpu

_NEG_BIG = -1e30  # large finite "minus infinity" (avoids NaN on all-masked rows)


def _linear_seq_attn_kernel(x_ref, mask_ref, w_ref, b_ref, o_ref):
    """One batch tile: scores = x @ W^T + b, mask, softmax over the L axis."""
    x = x_ref[...]                         # (B_TILE, L_pad, H), native dtype
    w = w_ref[...]                         # (1, H)
    bias = b_ref[0]                        # scalar bias from SMEM

    # nn.Linear(H, 1): contract H on the MXU, accumulate in f32 (bf16-safe).
    scores = jnp.einsum(
        "blh,oh->blo", x, w, preferred_element_type=jnp.float32
    )[..., 0]                              # (B_TILE, L_pad)
    scores = scores + bias

    # masked_fill_(x_mask, -inf)  (large finite value for robustness)
    scores = jnp.where(mask_ref[...] != 0, _NEG_BIG, scores)

    # Numerically-stable softmax over the lane-dense sequence axis.
    m = jnp.max(scores, axis=-1, keepdims=True)
    e = jnp.exp(scores - m)
    denom = jnp.sum(e, axis=-1, keepdims=True)
    o_ref[...] = (e * pl.reciprocal(denom, approx=True)).astype(o_ref.dtype)


def linear_seq_attn(x, x_mask, w, b):
    """alpha = softmax(Linear(H -> 1)(x)) over the (masked) sequence axis.

    x: (B, L, H) float32/bfloat16; x_mask: (B, L) int (1 = pad); w: (1, H); b: (1,)
    Returns alpha: (B, L) float32.
    """
    B, L, H = x.shape
    itemsize = jnp.dtype(x.dtype).itemsize

    # Lane-dense sequence axis: pad L to a multiple of 128.
    l_pad = ((L + 127) // 128) * 128

    # Batch tile: a single full block for tiny batches, otherwise a multiple of
    # 8 sized so a double-buffered x tile stays ~<=8 MiB (fits v7x VMEM too).
    if B <= 8:
        b_tile = B
    else:
        per_row = l_pad * H * itemsize
        budget = 4 * 1024 * 1024               # ~4 MiB x-tile per pipeline buffer
        rows = max(8, min(budget // per_row, B))
        b_tile = max(8, (rows // 8) * 8)
    b_pad = ((B + b_tile - 1) // b_tile) * b_tile

    # Pad batch/sequence; padded positions are flagged as padding in the mask.
    x_p = jnp.zeros((b_pad, l_pad, H), x.dtype).at[:B, :L, :].set(x)
    m_p = jnp.ones((b_pad, l_pad), jnp.int32).at[:B, :L].set(
        x_mask.astype(jnp.int32))
    b_smem = jnp.reshape(b, (1,)).astype(jnp.float32)

    grid = (b_pad // b_tile,)
    out = pl.pallas_call(
        _linear_seq_attn_kernel,
        out_shape=jax.ShapeDtypeStruct((b_pad, l_pad), jnp.float32),
        grid=grid,
        in_specs=[
            pl.BlockSpec((b_tile, l_pad, H), lambda i: (i, 0, 0)),   # x
            pl.BlockSpec((b_tile, l_pad), lambda i: (i, 0)),         # x_mask
            pl.BlockSpec((1, H), lambda i: (0, 0)),                  # W (Linear)
            pl.BlockSpec(memory_space=pltpu.MemorySpace.SMEM),       # bias
        ],
        out_specs=pl.BlockSpec((b_tile, l_pad), lambda i: (i, 0)),
        compiler_params=pltpu.CompilerParams(
            dimension_semantics=("parallel",),
            vmem_limit_bytes=32 * 1024 * 1024,
        ),
    )(x_p, m_p, w, b_smem)

    return out[:B, :L]


if __name__ == "__main__":
    B, L, H = 2, 8, 32
    key = jax.random.PRNGKey(0)
    kx, kw, kb = jax.random.split(key, 3)

    x = jax.random.normal(kx, (B, L, H), dtype=jnp.float32)

    # mask: 1 for padding, 0 for true tokens (every row keeps >=1 true token)
    lengths = jnp.array([L, 5], dtype=jnp.int32)
    positions = jnp.arange(L, dtype=jnp.int32)[None, :]
    x_mask = (positions >= lengths[:, None]).astype(jnp.int32)  # (B, L)

    # deterministic nn.Linear(H, 1) parameters
    bound = 1.0 / np.sqrt(H)
    w = jax.random.uniform(kw, (1, H), jnp.float32, -bound, bound)
    b = jax.random.uniform(kb, (1,), jnp.float32, -bound, bound)

    alpha = jax.block_until_ready(linear_seq_attn(x, x_mask, w, b))

    # pure-JAX reference (mirrors the PyTorch forward)
    scores_ref = jnp.einsum("blh,oh->bl", x, w) + b[0]
    scores_ref = jnp.where(x_mask != 0, -jnp.inf, scores_ref)
    alpha_ref = jax.nn.softmax(scores_ref, axis=-1)

    # tolerance accounts for the EUP approximate reciprocal in the kernel
    np.testing.assert_allclose(np.asarray(alpha), np.asarray(alpha_ref),
                               rtol=2e-3, atol=2e-3)
    print("KERNEL_OK")
</pallas_src>

<mosaic_0001>
module attributes {stable_mosaic.version = 11 : i64} {
  func.func @_linear_seq_attn_kernel(%arg0: i32, %arg1: memref<2x128x32xf32, #tpu.memory_space<vmem>>, %arg2: memref<2x128xi32, #tpu.memory_space<vmem>>, %arg3: memref<1x32xf32, #tpu.memory_space<vmem>>, %arg4: memref<1xf32, #tpu.memory_space<smem>>, %arg5: memref<2x128xf32, #tpu.memory_space<vmem>>) attributes {dimension_semantics = [#tpu.dimension_semantics<parallel>], iteration_bounds = array<i64: 1>, scalar_prefetch = 0 : i64, scratch_operands = 0 : i64, tpu.core_type = #tpu.core_type<tc>, window_params = [{transform_indices = @transform_0, window_bounds = array<i64: 2, 128, 32>}, {transform_indices = @transform_1, window_bounds = array<i64: 2, 128>}, {pipeline_mode = #tpu.pipeline_mode<synchronous>, transform_indices = @transform_2, window_bounds = array<i64: 1, 32>}, {transform_indices = @transform_3, window_bounds = array<i64: 1>}, {transform_indices = @transform_4, window_bounds = array<i64: 2, 128>}]} {
    %c0 = arith.constant 0 : index
    %c0_0 = arith.constant 0 : index
    %c0_1 = arith.constant 0 : index
    %0 = vector.load %arg1[%c0, %c0_0, %c0_1] : memref<2x128x32xf32, #tpu.memory_space<vmem>>, vector<2x128x32xf32>
    %c0_2 = arith.constant 0 : index
    %c0_3 = arith.constant 0 : index
    %1 = vector.load %arg3[%c0_2, %c0_3] : memref<1x32xf32, #tpu.memory_space<vmem>>, vector<1x32xf32>
    %c0_4 = arith.constant 0 : index
    %2 = memref.load %arg4[%c0_4] : memref<1xf32, #tpu.memory_space<smem>>
    "tpu.trace_start"() <{level = 10 : i32, message = "blh,oh->blo"}> : () -> ()
    %cst = arith.constant dense<0.000000e+00> : vector<2x128x1xf32>
    %3 = tpu.matmul %0, %1, %cst {dimension_numbers = #tpu.dot_dimension_numbers<[2], [1], [0, 1], [0], [0, 0, 0, 1, 1, 0], [], []>} : vector<2x128x32xf32>, vector<1x32xf32>, vector<2x128x1xf32> -> vector<2x128x1xf32>
    "tpu.trace_stop"() : () -> ()
    %4 = vector.shape_cast %3 : vector<2x128x1xf32> to vector<2x128xf32>
    %5 = vector.broadcast %2 : f32 to vector<2x128xf32>
    %6 = arith.addf %4, %5 : vector<2x128xf32>
    %c0_5 = arith.constant 0 : index
    %c0_6 = arith.constant 0 : index
    %7 = vector.load %arg2[%c0_5, %c0_6] : memref<2x128xi32, #tpu.memory_space<vmem>>, vector<2x128xi32>
    %c0_i32 = arith.constant 0 : i32
    %8 = vector.broadcast %c0_i32 : i32 to vector<2x128xi32>
    %9 = arith.cmpi ne, %7, %8 : vector<2x128xi32>
    %cst_7 = arith.constant -1.000000e+30 : f32
    %10 = vector.broadcast %cst_7 : f32 to vector<2x128xf32>
    %11 = arith.select %9, %10, %6 : vector<2x128xi1>, vector<2x128xf32>
    %cst_8 = arith.constant dense<0xFF800000> : vector<2xf32>
    %12 = vector.multi_reduction <maximumf>, %11, %cst_8 [1] : vector<2x128xf32> to vector<2xf32>
    %13 = vector.shape_cast %12 : vector<2xf32> to vector<2x1xf32>
    %14 = vector.broadcast %13 : vector<2x1xf32> to vector<2x128xf32>
    %15 = arith.subf %11, %14 : vector<2x128xf32>
    %16 = math.exp %15 : vector<2x128xf32>
    %cst_9 = arith.constant dense<0.000000e+00> : vector<2xf32>
    %17 = vector.multi_reduction <add>, %16, %cst_9 [1] : vector<2x128xf32> to vector<2xf32>
    %18 = vector.shape_cast %17 : vector<2xf32> to vector<2x1xf32>
    %19 = tpu.reciprocal %18 {approx = true} : vector<2x1xf32> -> vector<2x1xf32>
    %20 = vector.broadcast %19 : vector<2x1xf32> to vector<2x128xf32>
    %21 = arith.mulf %16, %20 : vector<2x128xf32>
    %c0_10 = arith.constant 0 : index
    %c0_11 = arith.constant 0 : index
    %22 = vector.load %arg5[%c0_10, %c0_11] : memref<2x128xf32, #tpu.memory_space<vmem>>, vector<2x128xf32>
    tpu.vector_store %arg5[%c0_10, %c0_11], %21 {strides = array<i32>} : memref<2x128xf32, #tpu.memory_space<vmem>>, vector<2x128xf32>,
    return
  }
  func.func @transform_0(%arg0: i32) -> (i32, i32, i32) {
    %c0_i32 = arith.constant 0 : i32
    %c0_i32_0 = arith.constant 0 : i32
    %c0_i32_1 = arith.constant 0 : i32
    return %arg0, %c0_i32, %c0_i32_0 : i32, i32, i32
  }
  func.func @transform_1(%arg0: i32) -> (i32, i32) {
    %c0_i32 = arith.constant 0 : i32
    %c0_i32_0 = arith.constant 0 : i32
    return %arg0, %c0_i32 : i32, i32
  }
  func.func @transform_2(%arg0: i32) -> (i32, i32) {
    %c0_i32 = arith.constant 0 : i32
    %c0_i32_0 = arith.constant 0 : i32
    %c0_i32_1 = arith.constant 0 : i32
    return %c0_i32, %c0_i32_0 : i32, i32
  }
  func.func @transform_3(%arg0: i32) -> i32 {
    %c0_i32 = arith.constant 0 : i32
    %c0_i32_0 = arith.constant 0 : i32
    return %c0_i32 : i32
  }
  func.func @transform_4(%arg0: i32) -> (i32, i32) {
    %c0_i32 = arith.constant 0 : i32
    %c0_i32_0 = arith.constant 0 : i32
    return %arg0, %c0_i32 : i32, i32
  }
}

</mosaic_0001>

<llo_original>
// kernel: tpu_custom_call.1
$region0: #{tpu_custom_call.1}
  #allocation0 [shape = 'u32[]', space=smem, size = 0x4, offset = 0x4, fixed_abs, tag = 'smem constant byte address 0x4 - core index']
  #allocation1 [shape = 'u32[144,128]{1,0:T(1,128)}', space=vmem, size = 0x12000, scoped, tag = 'internal scratch']
  #allocation2 [shape = 'f32[1]{0:T(128)S(6)}', space=smem, size = 0x200, scoped, tag = 'scoped memory for tpu_custom_call.1']
  %s0 = inlined_call_operand.vmem [shape: f32[2,128,32], index: 0, kind: input, shape index: {}]
  %s1 = inlined_call_operand.vmem [shape: s32[2,128], index: 1, kind: input, shape index: {}]
  %s2 = inlined_call_operand.vmem [shape: f32[1,32], index: 2, kind: input, shape index: {}]
  %s3 = inlined_call_operand.<no memory space> [shape: f32[1], index: 3, kind: input, shape index: {}]
  %s4 = inlined_call_operand.hbm [shape: f32[2,128], index: 4, kind: output, shape index: {}]
  %s5 = sld [smem:[#allocation0]]
  $region26: #{tpu_custom_call.1} parent=0
    _
  %s7 = ssub.s32 1, %s5
  %s8 = scalar_select 0, %s7, %s5
  %9 = sst [smem:[#allocation2]] %s3
  $region1: #{tpu_custom_call.1} parent=0
    #allocation3 [shape = 'u8[1024]{0}', space=vmem, size = 0x400, scoped, tag = 'output window, operand 0, single buffered']
    #allocation4 [shape = 's32[1]{0}', space=sflag, size = 0x4, scoped, tag = 'scoped memory for tpu_custom_call.1']
    %10 = vsyncpa [#allocation4], 0
    // Predicated region
    $region2: #{tpu_custom_call.1} parent=1 // pred_check
      _
    $region3: #{tpu_custom_call.1} parent=1 // pred_check_branch
      %12 = sbr.rel (0) target = $region5
    $region4: #{tpu_custom_call.1} parent=1 // pred_region
      _
    $region5: #{tpu_custom_call.1} parent=1 // pred_fallthru
      _
    // Predicated region
    $region6: #{tpu_custom_call.1} parent=1 // pred_check
      _
    $region7: #{tpu_custom_call.1} parent=1 // pred_check_branch
      %14 = sbr.rel (0) target = $region9
    $region8: #{tpu_custom_call.1} parent=1 // pred_region
      _
    $region9: #{tpu_custom_call.1} parent=1 // pred_fallthru
      _
    // Predicated region
    $region10: #{tpu_custom_call.1} parent=1 // pred_check
      _
    $region11: #{tpu_custom_call.1} parent=1 // pred_check_branch
      %16 = sbr.rel (0) target = $region13
    $region12: #{tpu_custom_call.1} parent=1 // pred_region
      _
    $region13: #{tpu_custom_call.1} parent=1 // pred_fallthru
      _
    // Predicated region
    $region14: #{tpu_custom_call.1} parent=1 // pred_check
      _
    $region15: #{tpu_custom_call.1} parent=1 // pred_check_branch
      %18 = sbr.rel (0) target = $region17
    $region16: #{tpu_custom_call.1} parent=1 // pred_region
      _
    $region17: #{tpu_custom_call.1} parent=1 // pred_fallthru
      _
    %v19 = vld [vmem:[%s0] sm:$0xff]
    %v20 = vld [vmem:[%s0 + $0x8] sm:$0xff]
    %v21 = vld [vmem:[%s0 + $0x10] sm:$0xff]
    %v22 = vld [vmem:[%s0 + $0x18] sm:$0xff]
    %v23 = vld [vmem:[%s0 + $0x20] sm:$0xff]
    %v24 = vld [vmem:[%s0 + $0x28] sm:$0xff]
    %v25 = vld [vmem:[%s0 + $0x30] sm:$0xff]
    %v26 = vld [vmem:[%s0 + $0x38] sm:$0xff]
    %v27 = vld [vmem:[%s0 + $0x40] sm:$0xff]
    %v28 = vld [vmem:[%s0 + $0x48] sm:$0xff]
    %v29 = vld [vmem:[%s0 + $0x50] sm:$0xff]
    %v30 = vld [vmem:[%s0 + $0x58] sm:$0xff]
    %v31 = vld [vmem:[%s0 + $0x60] sm:$0xff]
    %v32 = vld [vmem:[%s0 + $0x68] sm:$0xff]
    %v33 = vld [vmem:[%s0 + $0x70] sm:$0xff]
    %v34 = vld [vmem:[%s0 + $0x78] sm:$0xff]
    %v35 = vld [vmem:[%s0 + $0x80] sm:$0xff]
    %v36 = vld [vmem:[%s0 + $0x88] sm:$0xff]
    %v37 = vld [vmem:[%s0 + $0x90] sm:$0xff]
    %v38 = vld [vmem:[%s0 + $0x98] sm:$0xff]
    %v39 = vld [vmem:[%s0 + $0xa0] sm:$0xff]
    %v40 = vld [vmem:[%s0 + $0xa8] sm:$0xff]
    %v41 = vld [vmem:[%s0 + $0xb0] sm:$0xff]
    %v42 = vld [vmem:[%s0 + $0xb8] sm:$0xff]
    %v43 = vld [vmem:[%s0 + $0xc0] sm:$0xff]
    %v44 = vld [vmem:[%s0 + $0xc8] sm:$0xff]
    %v45 = vld [vmem:[%s0 + $0xd0] sm:$0xff]
    %v46 = vld [vmem:[%s0 + $0xd8] sm:$0xff]
    %v47 = vld [vmem:[%s0 + $0xe0] sm:$0xff]
    %v48 = vld [vmem:[%s0 + $0xe8] sm:$0xff]
    %v49 = vld [vmem:[%s0 + $0xf0] sm:$0xff]
    %v50 = vld [vmem:[%s0 + $0xf8] sm:$0xff]
    %v51 = vld [vmem:[%s2] sm:$0x1]
    %s52 = sld [smem:[#allocation2]]
    %v54 = vlaneseq
    %v55 = vshrl.u32 %v54, 7
    %v56 = vsub.s32 0, %v55
    %v57 = vrot.slane %v51, %v56
    %v59 = vmul.f32 %v19, %v57
    %v60 = vmul.f32 %v20, %v57
    %v61 = vmul.f32 %v21, %v57
    %v62 = vmul.f32 %v22, %v57
    %v63 = vmul.f32 %v23, %v57
    %v64 = vmul.f32 %v24, %v57
    %v65 = vmul.f32 %v25, %v57
    %v66 = vmul.f32 %v26, %v57
    %v67 = vmul.f32 %v27, %v57
    %v68 = vmul.f32 %v28, %v57
    %v69 = vmul.f32 %v29, %v57
    %v70 = vmul.f32 %v30, %v57
    %v71 = vmul.f32 %v31, %v57
    %v72 = vmul.f32 %v32, %v57
    %v73 = vmul.f32 %v33, %v57
    %v74 = vmul.f32 %v34, %v57
    %v75 = vmul.f32 %v35, %v57
    %v76 = vmul.f32 %v36, %v57
    %v77 = vmul.f32 %v37, %v57
    %v78 = vmul.f32 %v38, %v57
    %v79 = vmul.f32 %v39, %v57
    %v80 = vmul.f32 %v40, %v57
    %v81 = vmul.f32 %v41, %v57
    %v82 = vmul.f32 %v42, %v57
    %v83 = vmul.f32 %v43, %v57
    %v84 = vmul.f32 %v44, %v57
    %v85 = vmul.f32 %v45, %v57
    %v86 = vmul.f32 %v46, %v57
    %v87 = vmul.f32 %v47, %v57
    %v88 = vmul.f32 %v48, %v57
    %v89 = vmul.f32 %v49, %v57
    %v90 = vmul.f32 %v50, %v57
    %vm91 = vcmask 261120
    %v92 = vsel %vm91, %v59, 0.0
    %93 = vadd.xlane.f32.xlu0 %v92
    %v94 = vpop.xlane.xlu0 %93
    %v95 = vsel %vm91, %v60, 0.0
    %96 = vadd.xlane.f32.xlu0 %v95
    %v97 = vpop.xlane.xlu0 %96
    %v98 = vsel %vm91, %v61, 0.0
    %99 = vadd.xlane.f32.xlu0 %v98
    %v100 = vpop.xlane.xlu0 %99
    %v101 = vsel %vm91, %v62, 0.0
    %102 = vadd.xlane.f32.xlu0 %v101
    %v103 = vpop.xlane.xlu0 %102
    %v104 = vsel %vm91, %v63, 0.0
    %105 = vadd.xlane.f32.xlu0 %v104
    %v106 = vpop.xlane.xlu0 %105
    %v107 = vsel %vm91, %v64, 0.0
    %108 = vadd.xlane.f32.xlu0 %v107
    %v109 = vpop.xlane.xlu0 %108
    %v110 = vsel %vm91, %v65, 0.0
    %111 = vadd.xlane.f32.xlu0 %v110
    %v112 = vpop.xlane.xlu0 %111
    %v113 = vsel %vm91, %v66, 0.0
    %114 = vadd.xlane.f32.xlu0 %v113
    %v115 = vpop.xlane.xlu0 %114
    %v116 = vsel %vm91, %v67, 0.0
    %117 = vadd.xlane.f32.xlu0 %v116
    %v118 = vpop.xlane.xlu0 %117
    %v119 = vsel %vm91, %v68, 0.0
    %120 = vadd.xlane.f32.xlu0 %v119
    %v121 = vpop.xlane.xlu0 %120
    %v122 = vsel %vm91, %v69, 0.0
    %123 = vadd.xlane.f32.xlu0 %v122
    %v124 = vpop.xlane.xlu0 %123
    %v125 = vsel %vm91, %v70, 0.0
    %126 = vadd.xlane.f32.xlu0 %v125
    %v127 = vpop.xlane.xlu0 %126
    %v128 = vsel %vm91, %v71, 0.0
    %129 = vadd.xlane.f32.xlu0 %v128
    %v130 = vpop.xlane.xlu0 %129
    %v131 = vsel %vm91, %v72, 0.0
    %132 = vadd.xlane.f32.xlu0 %v131
    %v133 = vpop.xlane.xlu0 %132
    %v134 = vsel %vm91, %v73, 0.0
    %135 = vadd.xlane.f32.xlu0 %v134
    %v136 = vpop.xlane.xlu0 %135
    %v137 = vsel %vm91, %v74, 0.0
    %138 = vadd.xlane.f32.xlu0 %v137
    %v139 = vpop.xlane.xlu0 %138
    %v140 = vsel %vm91, %v75, 0.0
    %141 = vadd.xlane.f32.xlu0 %v140
    %v142 = vpop.xlane.xlu0 %141
    %v143 = vsel %vm91, %v76, 0.0
    %144 = vadd.xlane.f32.xlu0 %v143
    %v145 = vpop.xlane.xlu0 %144
    %v146 = vsel %vm91, %v77, 0.0
    %147 = vadd.xlane.f32.xlu0 %v146
    %v148 = vpop.xlane.xlu0 %147
    %v149 = vsel %vm91, %v78, 0.0
    %150 = vadd.xlane.f32.xlu0 %v149
    %v151 = vpop.xlane.xlu0 %150
    %v152 = vsel %vm91, %v79, 0.0
    %153 = vadd.xlane.f32.xlu0 %v152
    %v154 = vpop.xlane.xlu0 %153
    %v155 = vsel %vm91, %v80, 0.0
    %156 = vadd.xlane.f32.xlu0 %v155
    %v157 = vpop.xlane.xlu0 %156
    %v158 = vsel %vm91, %v81, 0.0
    %159 = vadd.xlane.f32.xlu0 %v158
    %v160 = vpop.xlane.xlu0 %159
    %v161 = vsel %vm91, %v82, 0.0
    %162 = vadd.xlane.f32.xlu0 %v161
    %v163 = vpop.xlane.xlu0 %162
    %v164 = vsel %vm91, %v83, 0.0
    %165 = vadd.xlane.f32.xlu0 %v164
    %v166 = vpop.xlane.xlu0 %165
    %v167 = vsel %vm91, %v84, 0.0
    %168 = vadd.xlane.f32.xlu0 %v167
    %v169 = vpop.xlane.xlu0 %168
    %v170 = vsel %vm91, %v85, 0.0
    %171 = vadd.xlane.f32.xlu0 %v170
    %v172 = vpop.xlane.xlu0 %171
    %v173 = vsel %vm91, %v86, 0.0
    %174 = vadd.xlane.f32.xlu0 %v173
    %v175 = vpop.xlane.xlu0 %174
    %v176 = vsel %vm91, %v87, 0.0
    %177 = vadd.xlane.f32.xlu0 %v176
    %v178 = vpop.xlane.xlu0 %177
    %v179 = vsel %vm91, %v88, 0.0
    %180 = vadd.xlane.f32.xlu0 %v179
    %v181 = vpop.xlane.xlu0 %180
    %v182 = vsel %vm91, %v89, 0.0
    %183 = vadd.xlane.f32.xlu0 %v182
    %v184 = vpop.xlane.xlu0 %183
    %v185 = vsel %vm91, %v90, 0.0
    %186 = vadd.xlane.f32.xlu0 %v185
    %v187 = vpop.xlane.xlu0 %186
    %v188 = vstv %s52
    %v189 = vadd.f32 %v94, %v188
    %v190 = vadd.f32 %v97, %v188
    %v191 = vadd.f32 %v100, %v188
    %v192 = vadd.f32 %v103, %v188
    %v193 = vadd.f32 %v106, %v188
    %v194 = vadd.f32 %v109, %v188
    %v195 = vadd.f32 %v112, %v188
    %v196 = vadd.f32 %v115, %v188
    %v197 = vadd.f32 %v118, %v188
    %v198 = vadd.f32 %v121, %v188
    %v199 = vadd.f32 %v124, %v188
    %v200 = vadd.f32 %v127, %v188
    %v201 = vadd.f32 %v130, %v188
    %v202 = vadd.f32 %v133, %v188
    %v203 = vadd.f32 %v136, %v188
    %v204 = vadd.f32 %v139, %v188
    %v205 = vadd.f32 %v142, %v188
    %v206 = vadd.f32 %v145, %v188
    %v207 = vadd.f32 %v148, %v188
    %v208 = vadd.f32 %v151, %v188
    %v209 = vadd.f32 %v154, %v188
    %v210 = vadd.f32 %v157, %v188
    %v211 = vadd.f32 %v160, %v188
    %v212 = vadd.f32 %v163, %v188
    %v213 = vadd.f32 %v166, %v188
    %v214 = vadd.f32 %v169, %v188
    %v215 = vadd.f32 %v172, %v188
    %v216 = vadd.f32 %v175, %v188
    %v217 = vadd.f32 %v178, %v188
    %v218 = vadd.f32 %v181, %v188
    %v219 = vadd.f32 %v184, %v188
    %v220 = vadd.f32 %v187, %v188
    %v221 = vld [vmem:[%s1] sm:$0x3]
    %vm222 = vcmp.ne.s32.totalorder %v221, 0
    %v255 = vlaneseq
    %v256 = vand.u32 %v255, 127
    %v257 = vlaneseq
    %v258 = vshrl.u32 %v257, 7
    %v259 = vsub.s32 %v256, %v258
    %v260 = vrot.slane %v189, %v259
    %v261 = vadd.s32 %v256, 4294967288
    %v262 = vlaneseq
    %v263 = vshrl.u32 %v262, 7
    %v264 = vsub.s32 %v261, %v263
    %v265 = vrot.slane %v190, %v264
    %vm266 = vcmask 130112
    %v267 = vsel %vm266, %v265, %v260
    %v268 = vadd.s32 %v256, 4294967280
    %v269 = vlaneseq
    %v270 = vshrl.u32 %v269, 7
    %v271 = vsub.s32 %v268, %v270
    %v272 = vrot.slane %v191, %v271
    %vm273 = vcmask 195712
    %v274 = vsel %vm273, %v272, %v267
    %v275 = vadd.s32 %v256, 4294967272
    %v276 = vlaneseq
    %v277 = vshrl.u32 %v276, 7
    %v278 = vsub.s32 %v275, %v277
    %v279 = vrot.slane %v192, %v278
    %vm280 = vcmask 261312
    %v281 = vsel %vm280, %v279, %v274
    %v282 = vadd.s32 %v256, 4294967264
    %v283 = vlaneseq
    %v284 = vshrl.u32 %v283, 7
    %v285 = vsub.s32 %v282, %v284
    %v286 = vrot.slane %v193, %v285
    %vm287 = vcmask 326912
    %v288 = vsel %vm287, %v286, %v281
    %v289 = vadd.s32 %v256, 4294967256
    %v290 = vlaneseq
    %v291 = vshrl.u32 %v290, 7
    %v292 = vsub.s32 %v289, %v291
    %v293 = vrot.slane %v194, %v292
    %vm294 = vcmask 392512
    %v295 = vsel %vm294, %v293, %v288
    %v296 = vadd.s32 %v256, 4294967248
    %v297 = vlaneseq
    %v298 = vshrl.u32 %v297, 7
    %v299 = vsub.s32 %v296, %v298
    %v300 = vrot.slane %v195, %v299
    %vm301 = vcmask 458112
    %v302 = vsel %vm301, %v300, %v295
    %v303 = vadd.s32 %v256, 4294967240
    %v304 = vlaneseq
    %v305 = vshrl.u32 %v304, 7
    %v306 = vsub.s32 %v303, %v305
    %v307 = vrot.slane %v196, %v306
    %vm308 = vcmask 523712
    %v309 = vsel %vm308, %v307, %v302
    %v310 = vadd.s32 %v256, 4294967232
    %v311 = vlaneseq
    %v312 = vshrl.u32 %v311, 7
    %v313 = vsub.s32 %v310, %v312
    %v314 = vrot.slane %v197, %v313
    %vm315 = vcmask 589312
    %v316 = vsel %vm315, %v314, %v309
    %v317 = vadd.s32 %v256, 4294967224
    %v318 = vlaneseq
    %v319 = vshrl.u32 %v318, 7
    %v320 = vsub.s32 %v317, %v319
    %v321 = vrot.slane %v198, %v320
    %vm322 = vcmask 654912
    %v323 = vsel %vm322, %v321, %v316
    %v324 = vadd.s32 %v256, 4294967216
    %v325 = vlaneseq
    %v326 = vshrl.u32 %v325, 7
    %v327 = vsub.s32 %v324, %v326
    %v328 = vrot.slane %v199, %v327
    %vm329 = vcmask 720512
    %v330 = vsel %vm329, %v328, %v323
    %v331 = vadd.s32 %v256, 4294967208
    %v332 = vlaneseq
    %v333 = vshrl.u32 %v332, 7
    %v334 = vsub.s32 %v331, %v333
    %v335 = vrot.slane %v200, %v334
    %vm336 = vcmask 786112
    %v337 = vsel %vm336, %v335, %v330
    %v338 = vadd.s32 %v256, 4294967200
    %v339 = vlaneseq
    %v340 = vshrl.u32 %v339, 7
    %v341 = vsub.s32 %v338, %v340
    %v342 = vrot.slane %v201, %v341
    %vm343 = vcmask 851712
    %v344 = vsel %vm343, %v342, %v337
    %v345 = vadd.s32 %v256, 4294967192
    %v346 = vlaneseq
    %v347 = vshrl.u32 %v346, 7
    %v348 = vsub.s32 %v345, %v347
    %v349 = vrot.slane %v202, %v348
    %vm350 = vcmask 917312
    %v351 = vsel %vm350, %v349, %v344
    %v352 = vadd.s32 %v256, 4294967184
    %v353 = vlaneseq
    %v354 = vshrl.u32 %v353, 7
    %v355 = vsub.s32 %v352, %v354
    %v356 = vrot.slane %v203, %v355
    %vm357 = vcmask 982912
    %v358 = vsel %vm357, %v356, %v351
    %v359 = vadd.s32 %v256, 4294967176
    %v360 = vlaneseq
    %v361 = vshrl.u32 %v360, 7
    %v362 = vsub.s32 %v359, %v361
    %v363 = vrot.slane %v204, %v362
    %vm364 = vcmask 1048512
    %v365 = vsel %vm364, %v363, %v358
    %v366 = vlaneseq
    %v367 = vshrl.u32 %v366, 7
    %v368 = vsub.s32 %v256, %v367
    %v369 = vrot.slane %v205, %v368
    %v370 = vlaneseq
    %v371 = vshrl.u32 %v370, 7
    %v372 = vsub.s32 %v261, %v371
    %v373 = vrot.slane %v206, %v372
    %v374 = vsel %vm266, %v373, %v369
    %v375 = vlaneseq
    %v376 = vshrl.u32 %v375, 7
    %v377 = vsub.s32 %v268, %v376
    %v378 = vrot.slane %v207, %v377
    %v379 = vsel %vm273, %v378, %v374
    %v380 = vlaneseq
    %v381 = vshrl.u32 %v380, 7
    %v382 = vsub.s32 %v275, %v381
    %v383 = vrot.slane %v208, %v382
    %v384 = vsel %vm280, %v383, %v379
    %v385 = vlaneseq
    %v386 = vshrl.u32 %v385, 7
    %v387 = vsub.s32 %v282, %v386
    %v388 = vrot.slane %v209, %v387
    %v389 = vsel %vm287, %v388, %v384
    %v390 = vlaneseq
    %v391 = vshrl.u32 %v390, 7
    %v392 = vsub.s32 %v289, %v391
    %v393 = vrot.slane %v210, %v392
    %v394 = vsel %vm294, %v393, %v389
    %v395 = vlaneseq
    %v396 = vshrl.u32 %v395, 7
    %v397 = vsub.s32 %v296, %v396
    %v398 = vrot.slane %v211, %v397
    %v399 = vsel %vm301, %v398, %v394
    %v400 = vlaneseq
    %v401 = vshrl.u32 %v400, 7
    %v402 = vsub.s32 %v303, %v401
    %v403 = vrot.slane %v212, %v402
    %v404 = vsel %vm308, %v403, %v399
    %v405 = vlaneseq
    %v406 = vshrl.u32 %v405, 7
    %v407 = vsub.s32 %v310, %v406
    %v408 = vrot.slane %v213, %v407
    %v409 = vsel %vm315, %v408, %v404
    %v410 = vlaneseq
    %v411 = vshrl.u32 %v410, 7
    %v412 = vsub.s32 %v317, %v411
    %v413 = vrot.slane %v214, %v412
    %v414 = vsel %vm322, %v413, %v409
    %v415 = vlaneseq
    %v416 = vshrl.u32 %v415, 7
    %v417 = vsub.s32 %v324, %v416
    %v418 = vrot.slane %v215, %v417
    %v419 = vsel %vm329, %v418, %v414
    %v420 = vlaneseq
    %v421 = vshrl.u32 %v420, 7
    %v422 = vsub.s32 %v331, %v421
    %v423 = vrot.slane %v216, %v422
    %v424 = vsel %vm336, %v423, %v419
    %v425 = vlaneseq
    %v426 = vshrl.u32 %v425, 7
    %v427 = vsub.s32 %v338, %v426
    %v428 = vrot.slane %v217, %v427
    %v429 = vsel %vm343, %v428, %v424
    %v430 = vlaneseq
    %v431 = vshrl.u32 %v430, 7
    %v432 = vsub.s32 %v345, %v431
    %v433 = vrot.slane %v218, %v432
    %v434 = vsel %vm350, %v433, %v429
    %v435 = vlaneseq
    %v436 = vshrl.u32 %v435, 7
    %v437 = vsub.s32 %v352, %v436
    %v438 = vrot.slane %v219, %v437
    %v439 = vsel %vm357, %v438, %v434
    %v440 = vlaneseq
    %v441 = vshrl.u32 %v440, 7
    %v442 = vsub.s32 %v359, %v441
    %v443 = vrot.slane %v220, %v442
    %v444 = vsel %vm364, %v443, %v439
    %vm445 = vcmask 1041409
    %v446 = vsel %vm445, %v444, %v365
    %v448 = vsel %vm222, -1e+30, %v446
    %vm449 = vcmask 1041408
    %v450 = vsel %vm449, %v448, -inf
    %451 = vmax.xlane.f32.xlu0 %v450
    %v452 = vpop.xlane.xlu0 %451
    %v453 = vsub.f32 %v448, %v452
    %v454 = vmul.f32 %v453, 1.442695
    %v455 = vpow.pop %v454
    %v456 = vsel %vm449, %v455, 0.0
    %457 = vadd.xlane.f32.xlu0 %v456
    %v458 = vpop.xlane.xlu0 %457
    %v459 = vrcp.pop %v458
    %v460 = vmul.f32 %v455, %v459
    %461 = vst [vmem:[#allocation3] sm:$0x3] %v460
    // Predicated region
    $region18: #{tpu_custom_call.1} parent=1 // pred_check
      _
    $region19: #{tpu_custom_call.1} parent=1 // pred_check_branch
      %463 = sbr.rel (0) target = $region21
    $region20: #{tpu_custom_call.1} parent=1 // pred_region
      %s465 = ssub.s32 32, 32
      %466 = vsyncadd [#allocation4], %s465
      %s468 = sshll.u32 [#allocation3], 4
      %s469 = int_to_ptr.vmem [resolvable:$true] %s468
      %471 = dma.vmem_to_hbm [thread:$0]  %s469, 32, %s4, [#allocation4]
    $region21: #{tpu_custom_call.1} parent=1 // pred_fallthru
      _
    // Predicated region
    $region22: #{tpu_custom_call.1} parent=1 // pred_check
      _
    $region23: #{tpu_custom_call.1} parent=1 // pred_check_branch
      %473 = sbr.rel (0) target = $region25
    $region24: #{tpu_custom_call.1} parent=1 // pred_region
      %474 = dma.done [#allocation4], 32
    $region25: #{tpu_custom_call.1} parent=1 // pred_fallthru
      _
    %475 = vsyncpa [#allocation4], 1

</llo_original>
